<compile_context>
chip_gen: v7x
topology: tpu7x:2x2x1
jax: 0.10.0
libtpu: 0.0.40
codegen_flags: <defaults>
</compile_context>

<pallas_src>
import jax
import jax.numpy as jnp
from jax.experimental import pallas as pl
from jax.experimental.pallas import tpu as pltpu

# Logical (PyTorch) feature sizes.
D_IN = 200     # l1 in_features
D_HID = 100    # l1 out_features (== l2 effective in_features, see TODO above)
D_OUT = 200    # l2 out_features

# Hidden dim padded to a lane multiple so the intermediate h is lane-dense.
D_HID_PAD = 128

# Batch tile for the pipelined path. 512 rows * 200 f32 = 400 KiB per x block
# (double-buffered), comfortably inside VMEM, and big enough to amortize the
# ~0.35 us per-grid-step overhead.
_BATCH_TILE = 512


def _mlp_kernel(x_ref, w1_ref, b1_ref, w2_ref, b2_ref, o_ref):
    # Two chained MXU matmuls + broadcast bias adds, all VMEM-resident.
    x = x_ref[...]                                                   # (tb, 200)
    h = jnp.dot(x, w1_ref[...], preferred_element_type=jnp.float32)  # (tb, 128)
    h = h + b1_ref[...]                                              # (1, 128) bcast
    y = jnp.dot(h, w2_ref[...], preferred_element_type=jnp.float32)  # (tb, 200)
    o_ref[...] = (y + b2_ref[...]).astype(o_ref.dtype)


def prepare_params(w1, b1, w2, b2):
    """One-time prep (reuse every forward): transpose PyTorch (out, in) weights
    to (in, out) and zero-pad only the hidden dim (100 -> 128). Zero fill
    guarantees padded lanes contribute exactly 0."""
    w1_p = jnp.zeros((D_IN, D_HID_PAD), jnp.float32).at[:, :D_HID].set(w1.T)
    b1_p = jnp.zeros((1, D_HID_PAD), jnp.float32).at[0, :D_HID].set(b1)
    w2_p = jnp.zeros((D_HID_PAD, D_OUT), jnp.float32).at[:D_HID, :].set(w2.T)
    b2_p = b2.reshape(1, D_OUT).astype(jnp.float32)
    return w1_p, b1_p, w2_p, b2_p


def _call_gridless(x, w1_p, b1_p, w2_p, b2_p):
    # Small batch: no grid, no double-buffer bookkeeping; every array is a
    # single whole-array VMEM block.
    B = x.shape[0]
    vmem = pl.BlockSpec(memory_space=pltpu.MemorySpace.VMEM)
    return pl.pallas_call(
        _mlp_kernel,
        out_shape=jax.ShapeDtypeStruct((B, D_OUT), jnp.float32),
        in_specs=[vmem, vmem, vmem, vmem, vmem],
        out_specs=vmem,
    )(x, w1_p, b1_p, w2_p, b2_p)


def _call_tiled(x, w1_p, b1_p, w2_p, b2_p):
    # Large batch: tile rows; weights/biases have constant index maps so they
    # are loaded once and stay VMEM-resident across steps.
    B = x.shape[0]
    grid = (pl.cdiv(B, _BATCH_TILE),)
    return pl.pallas_call(
        _mlp_kernel,
        out_shape=jax.ShapeDtypeStruct((B, D_OUT), jnp.float32),
        grid=grid,
        in_specs=[
            pl.BlockSpec((_BATCH_TILE, D_IN), lambda i: (i, 0)),
            pl.BlockSpec((D_IN, D_HID_PAD), lambda i: (0, 0)),
            pl.BlockSpec((1, D_HID_PAD), lambda i: (0, 0)),
            pl.BlockSpec((D_HID_PAD, D_OUT), lambda i: (0, 0)),
            pl.BlockSpec((1, D_OUT), lambda i: (0, 0)),
        ],
        out_specs=pl.BlockSpec((_BATCH_TILE, D_OUT), lambda i: (i, 0)),
        compiler_params=pltpu.CompilerParams(
            dimension_semantics=("parallel",)),
    )(x, w1_p, b1_p, w2_p, b2_p)


@jax.jit
def mlp_forward(x, w1_p, b1_p, w2_p, b2_p):
    """x: (B, D_IN) float32. Params must come from prepare_params()."""
    B = x.shape[0]
    if B <= _BATCH_TILE:
        return _call_gridless(x, w1_p, b1_p, w2_p, b2_p)
    return _call_tiled(x, w1_p, b1_p, w2_p, b2_p)


if __name__ == "__main__":
    key = jax.random.PRNGKey(0)
    k_x, k_w1, k_b1, k_w2, k_b2 = jax.random.split(key, 5)

    B = 8
    x = jax.random.normal(k_x, (B, D_IN), dtype=jnp.float32)

    # Deterministic parameter init mimicking nn.Linear's U(-1/sqrt(in), 1/sqrt(in)).
    bound1 = 1.0 / (D_IN ** 0.5)
    w1 = jax.random.uniform(k_w1, (D_HID, D_IN), jnp.float32, -bound1, bound1)
    b1 = jax.random.uniform(k_b1, (D_HID,), jnp.float32, -bound1, bound1)
    bound2 = 1.0 / (D_HID ** 0.5)
    w2 = jax.random.uniform(k_w2, (D_OUT, D_HID), jnp.float32, -bound2, bound2)
    b2 = jax.random.uniform(k_b2, (D_OUT,), jnp.float32, -bound2, bound2)

    # One-time weight prep (transpose + hidden-dim zero-pad), off the call path.
    params = jax.block_until_ready(prepare_params(w1, b1, w2, b2))

    out = jax.block_until_ready(mlp_forward(x, *params))

    # Pure-JAX reference check (original f32 semantics, unpadded).
    ref = (x @ w1.T + b1) @ w2.T + b2
    assert out.shape == (B, D_OUT), out.shape
    assert jnp.allclose(out, ref, atol=1e-4, rtol=1e-4), "mismatch vs reference"

    print("KERNEL_OK")
</pallas_src>

<mosaic_0001>
module attributes {stable_mosaic.version = 11 : i64} {
  func.func @_mlp_kernel(%arg0: memref<8x200xf32, #tpu.memory_space<vmem>>, %arg1: memref<200x128xf32, #tpu.memory_space<vmem>>, %arg2: memref<1x128xf32, #tpu.memory_space<vmem>>, %arg3: memref<128x200xf32, #tpu.memory_space<vmem>>, %arg4: memref<1x200xf32, #tpu.memory_space<vmem>>, %arg5: memref<8x200xf32, #tpu.memory_space<vmem>>) attributes {dimension_semantics = [], scalar_prefetch = 0 : i64, scratch_operands = 0 : i64, tpu.core_type = #tpu.core_type<tc>} {
    %c0 = arith.constant 0 : index
    %c0_0 = arith.constant 0 : index
    %0 = vector.load %arg0[%c0, %c0_0] : memref<8x200xf32, #tpu.memory_space<vmem>>, vector<8x200xf32>
    %c0_1 = arith.constant 0 : index
    %c0_2 = arith.constant 0 : index
    %1 = vector.load %arg1[%c0_1, %c0_2] : memref<200x128xf32, #tpu.memory_space<vmem>>, vector<200x128xf32>
    %cst = arith.constant dense<0.000000e+00> : vector<8x128xf32>
    %2 = tpu.matmul %0, %1, %cst {dimension_numbers = #tpu.dot_dimension_numbers<[1], [0], [0], [1], [0, 0, 1, 1], [], []>} : vector<8x200xf32>, vector<200x128xf32>, vector<8x128xf32> -> vector<8x128xf32>
    %c0_3 = arith.constant 0 : index
    %c0_4 = arith.constant 0 : index
    %3 = vector.load %arg2[%c0_3, %c0_4] : memref<1x128xf32, #tpu.memory_space<vmem>>, vector<1x128xf32>
    %4 = vector.broadcast %3 : vector<1x128xf32> to vector<8x128xf32>
    %5 = arith.addf %2, %4 : vector<8x128xf32>
    %c0_5 = arith.constant 0 : index
    %c0_6 = arith.constant 0 : index
    %6 = vector.load %arg3[%c0_5, %c0_6] : memref<128x200xf32, #tpu.memory_space<vmem>>, vector<128x200xf32>
    %cst_7 = arith.constant dense<0.000000e+00> : vector<8x200xf32>
    %7 = tpu.matmul %5, %6, %cst_7 {dimension_numbers = #tpu.dot_dimension_numbers<[1], [0], [0], [1], [0, 0, 1, 1], [], []>} : vector<8x128xf32>, vector<128x200xf32>, vector<8x200xf32> -> vector<8x200xf32>
    %c0_8 = arith.constant 0 : index
    %c0_9 = arith.constant 0 : index
    %8 = vector.load %arg4[%c0_8, %c0_9] : memref<1x200xf32, #tpu.memory_space<vmem>>, vector<1x200xf32>
    %9 = vector.broadcast %8 : vector<1x200xf32> to vector<8x200xf32>
    %10 = arith.addf %7, %9 : vector<8x200xf32>
    %c0_10 = arith.constant 0 : index
    %c0_11 = arith.constant 0 : index
    %11 = vector.load %arg5[%c0_10, %c0_11] : memref<8x200xf32, #tpu.memory_space<vmem>>, vector<8x200xf32>
    tpu.vector_store %arg5[%c0_10, %c0_11], %10 {strides = array<i32>} : memref<8x200xf32, #tpu.memory_space<vmem>>, vector<8x200xf32>,
    return
  }
}

</mosaic_0001>

<llo_original>
// kernel: mlp_forward.1
$region0: #{mlp_forward.1}
  #allocation0 [shape = 'u32[]', space=smem, size = 0x4, offset = 0x4, fixed_abs, tag = 'smem constant byte address 0x4 - core index']
  #allocation1 [shape = 'u32[144,128]{1,0:T(1,128)}', space=vmem, size = 0x12000, scoped, tag = 'internal scratch']
  %s0 = inlined_call_operand.vmem [shape: f32[8,200], index: 0, kind: input, shape index: {}]
  %s1 = inlined_call_operand.vmem [shape: f32[200,128], index: 1, kind: input, shape index: {}]
  %s2 = inlined_call_operand.vmem [shape: f32[1,128], index: 2, kind: input, shape index: {}]
  %s3 = inlined_call_operand.vmem [shape: f32[128,200], index: 3, kind: input, shape index: {}]
  %s4 = inlined_call_operand.vmem [shape: f32[1,200], index: 4, kind: input, shape index: {}]
  %s5 = inlined_call_operand.hbm [shape: f32[8,200], index: 5, kind: output, shape index: {}]
  %s6 = sld [smem:[#allocation0]]
  $region30: #{mlp_forward.1} parent=0
    _
  %s8 = ssub.s32 1, %s6
  %s9 = scalar_select 0, %s8, %s6
  $region1: #{mlp_forward.1} parent=0
    #allocation2 [shape = 'u8[8192]{0}', space=vmem, size = 0x2000, scoped, tag = 'output window, operand 0, single buffered']
    #allocation3 [shape = 's32[1]{0}', space=sflag, size = 0x4, scoped, tag = 'scoped memory for mlp_forward.1']
    %10 = vsyncpa [#allocation3], 0
    // Predicated region
    $region2: #{mlp_forward.1} parent=1 // pred_check
      _
    $region3: #{mlp_forward.1} parent=1 // pred_check_branch
      %12 = sbr.rel (0) target = $region5
    $region4: #{mlp_forward.1} parent=1 // pred_region
      _
    $region5: #{mlp_forward.1} parent=1 // pred_fallthru
      _
    // Predicated region
    $region6: #{mlp_forward.1} parent=1 // pred_check
      _
    $region7: #{mlp_forward.1} parent=1 // pred_check_branch
      %14 = sbr.rel (0) target = $region9
    $region8: #{mlp_forward.1} parent=1 // pred_region
      _
    $region9: #{mlp_forward.1} parent=1 // pred_fallthru
      _
    // Predicated region
    $region10: #{mlp_forward.1} parent=1 // pred_check
      _
    $region11: #{mlp_forward.1} parent=1 // pred_check_branch
      %16 = sbr.rel (0) target = $region13
    $region12: #{mlp_forward.1} parent=1 // pred_region
      _
    $region13: #{mlp_forward.1} parent=1 // pred_fallthru
      _
    // Predicated region
    $region14: #{mlp_forward.1} parent=1 // pred_check
      _
    $region15: #{mlp_forward.1} parent=1 // pred_check_branch
      %18 = sbr.rel (0) target = $region17
    $region16: #{mlp_forward.1} parent=1 // pred_region
      _
    $region17: #{mlp_forward.1} parent=1 // pred_fallthru
      _
    // Predicated region
    $region18: #{mlp_forward.1} parent=1 // pred_check
      _
    $region19: #{mlp_forward.1} parent=1 // pred_check_branch
      %20 = sbr.rel (0) target = $region21
    $region20: #{mlp_forward.1} parent=1 // pred_region
      _
    $region21: #{mlp_forward.1} parent=1 // pred_fallthru
      _
    %v21 = vld [vmem:[%s0] sm:$0xff]
    %v22 = vld [vmem:[%s0 + $0x8] sm:$0xff]
    %v23 = vld [vmem:[%s1] sm:$0xff]
    %v24 = vld [vmem:[%s1 + $0x8] sm:$0xff]
    %v25 = vld [vmem:[%s1 + $0x10] sm:$0xff]
    %v26 = vld [vmem:[%s1 + $0x18] sm:$0xff]
    %v27 = vld [vmem:[%s1 + $0x20] sm:$0xff]
    %v28 = vld [vmem:[%s1 + $0x28] sm:$0xff]
    %v29 = vld [vmem:[%s1 + $0x30] sm:$0xff]
    %v30 = vld [vmem:[%s1 + $0x38] sm:$0xff]
    %v31 = vld [vmem:[%s1 + $0x40] sm:$0xff]
    %v32 = vld [vmem:[%s1 + $0x48] sm:$0xff]
    %v33 = vld [vmem:[%s1 + $0x50] sm:$0xff]
    %v34 = vld [vmem:[%s1 + $0x58] sm:$0xff]
    %v35 = vld [vmem:[%s1 + $0x60] sm:$0xff]
    %v36 = vld [vmem:[%s1 + $0x68] sm:$0xff]
    %v37 = vld [vmem:[%s1 + $0x70] sm:$0xff]
    %v38 = vld [vmem:[%s1 + $0x78] sm:$0xff]
    %v39 = vld [vmem:[%s1 + $0x80] sm:$0xff]
    %v40 = vld [vmem:[%s1 + $0x88] sm:$0xff]
    %v41 = vld [vmem:[%s1 + $0x90] sm:$0xff]
    %v42 = vld [vmem:[%s1 + $0x98] sm:$0xff]
    %v43 = vld [vmem:[%s1 + $0xa0] sm:$0xff]
    %v44 = vld [vmem:[%s1 + $0xa8] sm:$0xff]
    %v45 = vld [vmem:[%s1 + $0xb0] sm:$0xff]
    %v46 = vld [vmem:[%s1 + $0xb8] sm:$0xff]
    %v47 = vld [vmem:[%s1 + $0xc0] sm:$0xff]
    %v48 = vld [vmem:[%s2] sm:$0x1]
    %v50 = vlaneseq
    %v51 = vshrl.u32 %v50, 7
    %v52 = vsub.s32 0, %v51
    %v53 = vrot.slane %v48, %v52
    %vm55 = vcmask 588800
    %v57 = vsel %vm55, %v22, 0
    %59 = vmatprep.subr.mxu0 0.0
    %60 = vmatpush1.msra.mxu0 %v23
    %61 = vmatprep.subr.mxu0 0.0
    %62 = vmatpush1.msra.mxu0 %v24
    %63 = vmatprep.subr.mxu0 0.0
    %64 = vmatpush1.msra.mxu0 %v25
    %65 = vmatprep.subr.mxu0 0.0
    %66 = vmatpush1.msra.mxu0 %v26
    %67 = vmatprep.subr.mxu0 0.0
    %68 = vmatpush1.msra.mxu0 %v27
    %69 = vmatprep.subr.mxu0 0.0
    %70 = vmatpush1.msra.mxu0 %v28
    %71 = vmatprep.subr.mxu0 0.0
    %72 = vmatpush1.msra.mxu0 %v29
    %73 = vmatprep.subr.mxu0 0.0
    %74 = vmatpush1.msra.mxu0 %v30
    %75 = vmatprep.subr.mxu0 0.0
    %76 = vmatpush1.msra.mxu0 %v31
    %77 = vmatprep.subr.mxu0 0.0
    %78 = vmatpush1.msra.mxu0 %v32
    %79 = vmatprep.subr.mxu0 0.0
    %80 = vmatpush1.msra.mxu0 %v33
    %81 = vmatprep.subr.mxu0 0.0
    %82 = vmatpush1.msra.mxu0 %v34
    %83 = vmatprep.subr.mxu0 0.0
    %84 = vmatpush1.msra.mxu0 %v35
    %85 = vmatprep.subr.mxu0 0.0
    %86 = vmatpush1.msra.mxu0 %v36
    %87 = vmatprep.subr.mxu0 0.0
    %88 = vmatpush1.msra.mxu0 %v37
    %89 = vmatprep.subr.mxu0 0.0
    %90 = vmatpush1.msra.mxu0 %v38
    %91 = vmatprep.subr.mxu0 0.0
    %92 = vmatpush1.msra.mxu0 %v39
    %93 = vmatprep.subr.mxu0 0.0
    %94 = vmatpush1.msra.mxu0 %v40
    %95 = vmatprep.subr.mxu0 0.0
    %96 = vmatpush1.msra.mxu0 %v41
    %97 = vmatprep.subr.mxu0 0.0
    %98 = vmatpush1.msra.mxu0 %v42
    %99 = vmatprep.subr.mxu0 0.0
    %100 = vmatpush1.msra.mxu0 %v43
    %101 = vmatprep.subr.mxu0 0.0
    %102 = vmatpush1.msra.mxu0 %v44
    %103 = vmatprep.subr.mxu0 0.0
    %104 = vmatpush1.msra.mxu0 %v45
    %105 = vmatprep.subr.mxu0 0.0
    %106 = vmatpush1.msra.mxu0 %v46
    %107 = vmatprep.subr.mxu0 0.0
    %108 = vmatpush1.msra.mxu0 %v47
    %109 = vmatprep.subr.mxu0 0.0
    %110 = vmatpush1.msra.mxu0 0.0
    %111 = vmatprep.subr.mxu0 0.0
    %112 = vmatpush1.msra.mxu0 0.0
    %113 = vmatprep.subr.mxu0 0.0
    %114 = vmatpush1.msra.mxu0 0.0
    %115 = vmatprep.subr.mxu0 0.0
    %116 = vmatpush1.msra.mxu0 0.0
    %117 = vmatprep.subr.mxu0 0.0
    %118 = vmatpush1.msra.mxu0 0.0
    %119 = vmatprep.subr.mxu0 0.0
    %120 = vmatpush1.msra.mxu0 0.0
    %121 = vmatprep.subr.mxu0 0.0
    %122 = vmatpush1.msra.mxu0 0.0
    %123 = vmatprep.mubr.f32.mxu0 %v57
    %124 = vmatmul.mubr.f32.gmra.mrb[0].mxu0 %v21
    %v125 = vpop.f32.mrb[0].mxu0
    %v126 = vadd.f32 %v53, %v125
    %v127 = vpop.f32.mrb[0].mxu0
    %128 = vdwg.mxu0
    %v129 = vld [vmem:[%s3] sm:$0xff]
    %v130 = vld [vmem:[%s3 + $0x8] sm:$0xff]
    %v131 = vld [vmem:[%s3 + $0x10] sm:$0xff]
    %v132 = vld [vmem:[%s3 + $0x18] sm:$0xff]
    %v133 = vld [vmem:[%s3 + $0x20] sm:$0xff]
    %v134 = vld [vmem:[%s3 + $0x28] sm:$0xff]
    %v135 = vld [vmem:[%s3 + $0x30] sm:$0xff]
    %v136 = vld [vmem:[%s3 + $0x38] sm:$0xff]
    %v137 = vld [vmem:[%s3 + $0x40] sm:$0xff]
    %v138 = vld [vmem:[%s3 + $0x48] sm:$0xff]
    %v139 = vld [vmem:[%s3 + $0x50] sm:$0xff]
    %v140 = vld [vmem:[%s3 + $0x58] sm:$0xff]
    %v141 = vld [vmem:[%s3 + $0x60] sm:$0xff]
    %v142 = vld [vmem:[%s3 + $0x68] sm:$0xff]
    %v143 = vld [vmem:[%s3 + $0x70] sm:$0xff]
    %v144 = vld [vmem:[%s3 + $0x78] sm:$0xff]
    %v145 = vld [vmem:[%s3 + $0x80] sm:$0xff]
    %v146 = vld [vmem:[%s3 + $0x88] sm:$0xff]
    %v147 = vld [vmem:[%s3 + $0x90] sm:$0xff]
    %v148 = vld [vmem:[%s3 + $0x98] sm:$0xff]
    %v149 = vld [vmem:[%s3 + $0xa0] sm:$0xff]
    %v150 = vld [vmem:[%s3 + $0xa8] sm:$0xff]
    %v151 = vld [vmem:[%s3 + $0xb0] sm:$0xff]
    %v152 = vld [vmem:[%s3 + $0xb8] sm:$0xff]
    %v153 = vld [vmem:[%s3 + $0xc0] sm:$0xff]
    %v154 = vld [vmem:[%s3 + $0xc8] sm:$0xff]
    %v155 = vld [vmem:[%s3 + $0xd0] sm:$0xff]
    %v156 = vld [vmem:[%s3 + $0xd8] sm:$0xff]
    %v157 = vld [vmem:[%s3 + $0xe0] sm:$0xff]
    %v158 = vld [vmem:[%s3 + $0xe8] sm:$0xff]
    %v159 = vld [vmem:[%s3 + $0xf0] sm:$0xff]
    %v160 = vld [vmem:[%s3 + $0xf8] sm:$0xff]
    %v161 = vld [vmem:[%s4] sm:$0x3]
    %v163 = vlaneseq
    %v164 = vshrl.u32 %v163, 7
    %v165 = vsub.s32 0, %v164
    %v166 = vrot.slane %v161, %v165
    %v167 = vlaneseq
    %v168 = vshrl.u32 %v167, 7
    %v169 = vsub.s32 1, %v168
    %v170 = vrot.slane %v161, %v169
    %173 = vmatprep.subr.mxu0 %v130
    %174 = vmatpush1.msra.mxu0 %v129
    %175 = vmatprep.subr.mxu0 %v132
    %176 = vmatpush1.msra.mxu0 %v131
    %177 = vmatprep.subr.mxu0 %v134
    %178 = vmatpush1.msra.mxu0 %v133
    %179 = vmatprep.subr.mxu0 %v136
    %180 = vmatpush1.msra.mxu0 %v135
    %181 = vmatprep.subr.mxu0 %v138
    %182 = vmatpush1.msra.mxu0 %v137
    %183 = vmatprep.subr.mxu0 %v140
    %184 = vmatpush1.msra.mxu0 %v139
    %185 = vmatprep.subr.mxu0 %v142
    %186 = vmatpush1.msra.mxu0 %v141
    %187 = vmatprep.subr.mxu0 %v144
    %188 = vmatpush1.msra.mxu0 %v143
    %189 = vmatprep.subr.mxu0 %v146
    %190 = vmatpush1.msra.mxu0 %v145
    %191 = vmatprep.subr.mxu0 %v148
    %192 = vmatpush1.msra.mxu0 %v147
    %193 = vmatprep.subr.mxu0 %v150
    %194 = vmatpush1.msra.mxu0 %v149
    %195 = vmatprep.subr.mxu0 %v152
    %196 = vmatpush1.msra.mxu0 %v151
    %197 = vmatprep.subr.mxu0 %v154
    %198 = vmatpush1.msra.mxu0 %v153
    %199 = vmatprep.subr.mxu0 %v156
    %200 = vmatpush1.msra.mxu0 %v155
    %201 = vmatprep.subr.mxu0 %v158
    %202 = vmatpush1.msra.mxu0 %v157
    %203 = vmatprep.subr.mxu0 %v160
    %204 = vmatpush1.msra.mxu0 %v159
    %205 = vmatprep.subr.mxu0 0.0
    %206 = vmatpush1.msra.mxu0 0.0
    %207 = vmatprep.subr.mxu0 0.0
    %208 = vmatpush1.msra.mxu0 0.0
    %209 = vmatprep.subr.mxu0 0.0
    %210 = vmatpush1.msra.mxu0 0.0
    %211 = vmatprep.subr.mxu0 0.0
    %212 = vmatpush1.msra.mxu0 0.0
    %213 = vmatprep.subr.mxu0 0.0
    %214 = vmatpush1.msra.mxu0 0.0
    %215 = vmatprep.subr.mxu0 0.0
    %216 = vmatpush1.msra.mxu0 0.0
    %217 = vmatprep.subr.mxu0 0.0
    %218 = vmatpush1.msra.mxu0 0.0
    %219 = vmatprep.subr.mxu0 0.0
    %220 = vmatpush1.msra.mxu0 0.0
    %221 = vmatprep.subr.mxu0 0.0
    %222 = vmatpush1.msra.mxu0 0.0
    %223 = vmatprep.subr.mxu0 0.0
    %224 = vmatpush1.msra.mxu0 0.0
    %225 = vmatprep.subr.mxu0 0.0
    %226 = vmatpush1.msra.mxu0 0.0
    %227 = vmatprep.subr.mxu0 0.0
    %228 = vmatpush1.msra.mxu0 0.0
    %229 = vmatprep.subr.mxu0 0.0
    %230 = vmatpush1.msra.mxu0 0.0
    %231 = vmatprep.subr.mxu0 0.0
    %232 = vmatpush1.msra.mxu0 0.0
    %233 = vmatprep.subr.mxu0 0.0
    %234 = vmatpush1.msra.mxu0 0.0
    %235 = vmatprep.subr.mxu0 0.0
    %236 = vmatpush1.msra.mxu0 0.0
    %237 = vmatprep.mubr.f32.mxu0 0.0
    %238 = vmatmul.mubr.f32.gmra.mrb[0].mxu0 %v126
    %v239 = vpop.f32.mrb[0].mxu0
    %v240 = vadd.f32 %v166, %v239
    %v241 = vpop.f32.mrb[0].mxu0
    %v242 = vadd.f32 %v170, %v241
    %243 = vdwg.mxu0
    %244 = vst [vmem:[#allocation2] sm:$0xff] %v240
    %245 = vst.msk [vmem:[#allocation2 + $0x8] sm:$0xff] %vm55, %v242
    // Predicated region
    $region22: #{mlp_forward.1} parent=1 // pred_check
      _
    $region23: #{mlp_forward.1} parent=1 // pred_check_branch
      %247 = sbr.rel (0) target = $region25
    $region24: #{mlp_forward.1} parent=1 // pred_region
      %s249 = ssub.s32 256, 256
      %250 = vsyncadd [#allocation3], %s249
      %s252 = sshll.u32 [#allocation2], 4
      %s253 = int_to_ptr.vmem [resolvable:$true] %s252
      %255 = dma.vmem_to_hbm [thread:$0]  %s253, 256, %s5, [#allocation3]
    $region25: #{mlp_forward.1} parent=1 // pred_fallthru
      _
    // Predicated region
    $region26: #{mlp_forward.1} parent=1 // pred_check
      _
    $region27: #{mlp_forward.1} parent=1 // pred_check_branch
      %257 = sbr.rel (0) target = $region29
    $region28: #{mlp_forward.1} parent=1 // pred_region
      %258 = dma.done [#allocation3], 256
    $region29: #{mlp_forward.1} parent=1 // pred_fallthru
      _
    %259 = vsyncpa [#allocation3], 1

</llo_original>
